<compile_context>
chip_gen: v7x
topology: tpu7x:2x2x1
jax: 0.10.0
libtpu: 0.0.40
codegen_flags: <defaults>
</compile_context>

<pallas_src>
import functools

import jax
import jax.numpy as jnp
from jax import lax
from jax.experimental import pallas as pl
from jax.experimental.pallas import tpu as pltpu


# ----------------------------- Pallas kernel ------------------------------

def _fused_gcn_kernel(adj_ref, x_ref, *refs, num_layers):
    """Fused 3-layer GCN + concat + linear head + log_softmax.

    refs layout: [wcat_0, b_0, wcat_1, b_1, ..., wcat_{L-1}, b_{L-1},
                  pred_w, pred_b, out_ref]
    wcat_i = concat([W_i, W_self_i], axis=1)  -> [D_in_i, 2*D_out_i]
    """
    out_ref = refs[-1]
    pb_ref = refs[-2]
    pw_ref = refs[-3]
    layer_refs = refs[:-3]

    adj = adj_ref[...]
    h = x_ref[...]
    ys = []
    for i in range(num_layers):
        wcat = layer_refs[2 * i][...]       # [D_in, 2*D_out]
        b = layer_refs[2 * i + 1][...]      # [1, D_out]
        d_out = wcat.shape[1] // 2

        # One MXU op for both the neighbor and the self transform.
        xw2 = jnp.dot(h, wcat, preferred_element_type=jnp.float32)
        xw, xws = xw2[:, :d_out], xw2[:, d_out:]

        # Reassociated contraction: adj @ (x @ W)  (N^2 * D_out FLOPs).
        y = jnp.dot(adj, xw, preferred_element_type=jnp.float32) + xws + b

        # F.normalize(y, p=2, dim=-1): y / max(||y||, 1e-12).
        # rsqrt on the squared norm, clamped at 1e-24 == (1e-12)^2.
        sq = jnp.sum(y * y, axis=-1, keepdims=True)
        y = y * lax.rsqrt(jnp.maximum(sq, 1e-24))

        if i != num_layers - 1:
            # ReLU then BatchNorm1d(num_nodes) applied to [1, N, H] in training
            # mode with batch=1 -> per-row mean/var over features, eps=1e-5,
            # gamma=1, beta=0.
            y = jnp.maximum(y, 0.0)
            mean = jnp.mean(y, axis=-1, keepdims=True)
            var = jnp.mean((y - mean) ** 2, axis=-1, keepdims=True)
            y = (y - mean) * lax.rsqrt(var + 1e-5)

        ys.append(y)
        h = y

    # Embedding stays in VMEM / vregs; only the final prediction hits HBM.
    emb = jnp.concatenate(ys, axis=-1)                      # [N, pred_in]
    logits = jnp.dot(emb, pw_ref[...],
                     preferred_element_type=jnp.float32) + pb_ref[...]

    # log_softmax along the label axis.
    m = jnp.max(logits, axis=-1, keepdims=True)
    z = logits - m
    lse = jnp.log(jnp.sum(jnp.exp(z), axis=-1, keepdims=True))
    out_ref[...] = z - lse


def fused_gcn_forward(adj, x, convs, pred_w, pred_b):
    """Run the whole GcnEncoderNode forward in one pallas_call."""
    n = x.shape[0]
    label_dim = pred_w.shape[1]
    num_layers = len(convs)

    args = [adj, x]
    for c in convs:
        # Merge W and W_self so each layer needs a single x-side matmul.
        wcat = jnp.concatenate([c["w"], c["w_self"]], axis=1)
        args.append(wcat)
        args.append(c["b"].reshape(1, -1))
    args.append(pred_w)
    args.append(pred_b.reshape(1, -1))

    kernel = functools.partial(_fused_gcn_kernel, num_layers=num_layers)
    return pl.pallas_call(
        kernel,
        out_shape=jax.ShapeDtypeStruct((n, label_dim), jnp.float32),
        in_specs=[pl.BlockSpec(memory_space=pltpu.MemorySpace.VMEM)] * len(args),
        out_specs=pl.BlockSpec(memory_space=pltpu.MemorySpace.VMEM),
        compiler_params=pltpu.CompilerParams(vmem_limit_bytes=64 << 20),
    )(*args)


# ------------------------------ JAX glue ----------------------------------

def xavier_uniform(key, shape, gain):
    fan_in, fan_out = shape
    bound = gain * (6.0 / (fan_in + fan_out)) ** 0.5
    return jax.random.uniform(key, shape, jnp.float32, -bound, bound)


def init_params(key, input_dim, hidden_dim, embedding_dim, label_dim, num_layers):
    gain = 2.0 ** 0.5  # nn.init.calculate_gain('relu')
    dims = ([(input_dim, hidden_dim)]
            + [(hidden_dim, hidden_dim)] * (num_layers - 2)
            + [(hidden_dim, embedding_dim)])
    convs = []
    for din, dout in dims:
        key, k1, k2 = jax.random.split(key, 3)
        convs.append(dict(
            w=xavier_uniform(k1, (din, dout), gain),
            w_self=xavier_uniform(k2, (din, dout), gain),
            b=jnp.zeros((dout,), jnp.float32),      # init.constant_(bias, 0.0)
        ))
    pred_in = hidden_dim * (num_layers - 1) + embedding_dim  # concat=True
    key, k1, k2 = jax.random.split(key, 3)
    bound = 1.0 / (pred_in ** 0.5)
    return {
        "convs": convs,
        "pred_w": jax.random.uniform(k1, (pred_in, label_dim), jnp.float32,
                                     -bound, bound),
        "pred_b": jax.random.uniform(k2, (label_dim,), jnp.float32,
                                     -bound, bound),
    }


def to_dense_adj(edge_index, num_nodes):
    # torch_geometric.utils.to_dense_adj with max_num_nodes=N (batch dim of
    # size 1 dropped). Duplicate edges accumulate, matching the reference.
    src, dst = edge_index[0], edge_index[1]
    adj = jnp.zeros((num_nodes, num_nodes), jnp.float32)
    return adj.at[src, dst].add(1.0)


def gcn_encoder_node_forward(params, x, edge_index):
    n = x.shape[0]
    adj = to_dense_adj(edge_index, n)
    return fused_gcn_forward(adj, x, params["convs"],
                             params["pred_w"], params["pred_b"])


if __name__ == "__main__":
    N = 16            # number of nodes (x.shape[0])
    INPUT_DIM = 8
    HIDDEN_DIM = 32
    EMBEDDING_DIM = 16
    LABEL_DIM = 4
    NUM_LAYERS = 3
    NUM_EDGES = 40

    key = jax.random.PRNGKey(0)
    kx, ke, kp = jax.random.split(key, 3)
    x = jax.random.normal(kx, (N, INPUT_DIM), jnp.float32)
    edge_index = jax.random.randint(ke, (2, NUM_EDGES), 0, N)  # PyG edge_index

    params = init_params(kp, INPUT_DIM, HIDDEN_DIM, EMBEDDING_DIM,
                         LABEL_DIM, NUM_LAYERS)

    out = gcn_encoder_node_forward(params, x, edge_index)
    out = jax.block_until_ready(out)
    assert out.shape == (N, LABEL_DIM)
    assert bool(jnp.all(jnp.isfinite(out)))
    # rows of log_softmax must exp-sum to 1
    assert bool(jnp.allclose(jnp.sum(jnp.exp(out), axis=-1), 1.0, atol=1e-4))
    print("KERNEL_OK")
</pallas_src>

<mosaic_0001>
module attributes {stable_mosaic.version = 11 : i64} {
  func.func @_fused_gcn_kernel(%arg0: memref<16x16xf32, #tpu.memory_space<vmem>>, %arg1: memref<16x8xf32, #tpu.memory_space<vmem>>, %arg2: memref<8x64xf32, #tpu.memory_space<vmem>>, %arg3: memref<1x32xf32, #tpu.memory_space<vmem>>, %arg4: memref<32x64xf32, #tpu.memory_space<vmem>>, %arg5: memref<1x32xf32, #tpu.memory_space<vmem>>, %arg6: memref<32x32xf32, #tpu.memory_space<vmem>>, %arg7: memref<1x16xf32, #tpu.memory_space<vmem>>, %arg8: memref<80x4xf32, #tpu.memory_space<vmem>>, %arg9: memref<1x4xf32, #tpu.memory_space<vmem>>, %arg10: memref<16x4xf32, #tpu.memory_space<vmem>>) attributes {dimension_semantics = [], scalar_prefetch = 0 : i64, scratch_operands = 0 : i64, tpu.core_type = #tpu.core_type<tc>} {
    %c0 = arith.constant 0 : index
    %c0_0 = arith.constant 0 : index
    %0 = vector.load %arg0[%c0, %c0_0] : memref<16x16xf32, #tpu.memory_space<vmem>>, vector<16x16xf32>
    %c0_1 = arith.constant 0 : index
    %c0_2 = arith.constant 0 : index
    %1 = vector.load %arg1[%c0_1, %c0_2] : memref<16x8xf32, #tpu.memory_space<vmem>>, vector<16x8xf32>
    %c0_3 = arith.constant 0 : index
    %c0_4 = arith.constant 0 : index
    %2 = vector.load %arg2[%c0_3, %c0_4] : memref<8x64xf32, #tpu.memory_space<vmem>>, vector<8x64xf32>
    %c0_5 = arith.constant 0 : index
    %c0_6 = arith.constant 0 : index
    %3 = vector.load %arg3[%c0_5, %c0_6] : memref<1x32xf32, #tpu.memory_space<vmem>>, vector<1x32xf32>
    %cst = arith.constant dense<0.000000e+00> : vector<16x64xf32>
    %4 = tpu.matmul %1, %2, %cst {dimension_numbers = #tpu.dot_dimension_numbers<[1], [0], [0], [1], [0, 0, 1, 1], [], []>} : vector<16x8xf32>, vector<8x64xf32>, vector<16x64xf32> -> vector<16x64xf32>
    %5 = vector.extract_strided_slice %4 {offsets = [0, 0], sizes = [16, 32], strides = [1, 1]} : vector<16x64xf32> to vector<16x32xf32>
    %6 = vector.extract_strided_slice %4 {offsets = [0, 32], sizes = [16, 32], strides = [1, 1]} : vector<16x64xf32> to vector<16x32xf32>
    %cst_7 = arith.constant dense<0.000000e+00> : vector<16x32xf32>
    %7 = tpu.matmul %0, %5, %cst_7 {dimension_numbers = #tpu.dot_dimension_numbers<[1], [0], [0], [1], [0, 0, 1, 1], [], []>} : vector<16x16xf32>, vector<16x32xf32>, vector<16x32xf32> -> vector<16x32xf32>
    %8 = arith.addf %7, %6 : vector<16x32xf32>
    %9 = vector.broadcast %3 : vector<1x32xf32> to vector<16x32xf32>
    %10 = arith.addf %8, %9 : vector<16x32xf32>
    %11 = arith.mulf %10, %10 : vector<16x32xf32>
    %cst_8 = arith.constant dense<0.000000e+00> : vector<16xf32>
    %12 = vector.multi_reduction <add>, %11, %cst_8 [1] : vector<16x32xf32> to vector<16xf32>
    %13 = vector.shape_cast %12 : vector<16xf32> to vector<16x1xf32>
    %cst_9 = arith.constant 1.000000e-24 : f32
    %14 = vector.broadcast %cst_9 : f32 to vector<16x1xf32>
    %15 = arith.maximumf %13, %14 : vector<16x1xf32>
    %16 = math.rsqrt %15 : vector<16x1xf32>
    %17 = vector.broadcast %16 : vector<16x1xf32> to vector<16x32xf32>
    %18 = arith.mulf %10, %17 : vector<16x32xf32>
    %cst_10 = arith.constant 0.000000e+00 : f32
    %19 = vector.broadcast %cst_10 : f32 to vector<16x32xf32>
    %20 = arith.maximumf %18, %19 : vector<16x32xf32>
    %cst_11 = arith.constant dense<0.000000e+00> : vector<16xf32>
    %21 = vector.multi_reduction <add>, %20, %cst_11 [1] : vector<16x32xf32> to vector<16xf32>
    %22 = vector.shape_cast %21 : vector<16xf32> to vector<16x1xf32>
    %cst_12 = arith.constant 3.200000e+01 : f32
    %23 = vector.broadcast %cst_12 : f32 to vector<16x1xf32>
    %24 = arith.divf %22, %23 : vector<16x1xf32>
    %25 = vector.broadcast %24 : vector<16x1xf32> to vector<16x32xf32>
    %26 = arith.subf %20, %25 : vector<16x32xf32>
    %27 = arith.mulf %26, %26 : vector<16x32xf32>
    %cst_13 = arith.constant dense<0.000000e+00> : vector<16xf32>
    %28 = vector.multi_reduction <add>, %27, %cst_13 [1] : vector<16x32xf32> to vector<16xf32>
    %29 = vector.shape_cast %28 : vector<16xf32> to vector<16x1xf32>
    %cst_14 = arith.constant 3.200000e+01 : f32
    %30 = vector.broadcast %cst_14 : f32 to vector<16x1xf32>
    %31 = arith.divf %29, %30 : vector<16x1xf32>
    %32 = vector.broadcast %24 : vector<16x1xf32> to vector<16x32xf32>
    %33 = arith.subf %20, %32 : vector<16x32xf32>
    %cst_15 = arith.constant 9.99999974E-6 : f32
    %34 = vector.broadcast %cst_15 : f32 to vector<16x1xf32>
    %35 = arith.addf %31, %34 : vector<16x1xf32>
    %36 = math.rsqrt %35 : vector<16x1xf32>
    %37 = vector.broadcast %36 : vector<16x1xf32> to vector<16x32xf32>
    %38 = arith.mulf %33, %37 : vector<16x32xf32>
    %c0_16 = arith.constant 0 : index
    %c0_17 = arith.constant 0 : index
    %39 = vector.load %arg4[%c0_16, %c0_17] : memref<32x64xf32, #tpu.memory_space<vmem>>, vector<32x64xf32>
    %c0_18 = arith.constant 0 : index
    %c0_19 = arith.constant 0 : index
    %40 = vector.load %arg5[%c0_18, %c0_19] : memref<1x32xf32, #tpu.memory_space<vmem>>, vector<1x32xf32>
    %cst_20 = arith.constant dense<0.000000e+00> : vector<16x64xf32>
    %41 = tpu.matmul %38, %39, %cst_20 {dimension_numbers = #tpu.dot_dimension_numbers<[1], [0], [0], [1], [0, 0, 1, 1], [], []>} : vector<16x32xf32>, vector<32x64xf32>, vector<16x64xf32> -> vector<16x64xf32>
    %42 = vector.extract_strided_slice %41 {offsets = [0, 0], sizes = [16, 32], strides = [1, 1]} : vector<16x64xf32> to vector<16x32xf32>
    %43 = vector.extract_strided_slice %41 {offsets = [0, 32], sizes = [16, 32], strides = [1, 1]} : vector<16x64xf32> to vector<16x32xf32>
    %cst_21 = arith.constant dense<0.000000e+00> : vector<16x32xf32>
    %44 = tpu.matmul %0, %42, %cst_21 {dimension_numbers = #tpu.dot_dimension_numbers<[1], [0], [0], [1], [0, 0, 1, 1], [], []>} : vector<16x16xf32>, vector<16x32xf32>, vector<16x32xf32> -> vector<16x32xf32>
    %45 = arith.addf %44, %43 : vector<16x32xf32>
    %46 = vector.broadcast %40 : vector<1x32xf32> to vector<16x32xf32>
    %47 = arith.addf %45, %46 : vector<16x32xf32>
    %48 = arith.mulf %47, %47 : vector<16x32xf32>
    %cst_22 = arith.constant dense<0.000000e+00> : vector<16xf32>
    %49 = vector.multi_reduction <add>, %48, %cst_22 [1] : vector<16x32xf32> to vector<16xf32>
    %50 = vector.shape_cast %49 : vector<16xf32> to vector<16x1xf32>
    %cst_23 = arith.constant 1.000000e-24 : f32
    %51 = vector.broadcast %cst_23 : f32 to vector<16x1xf32>
    %52 = arith.maximumf %50, %51 : vector<16x1xf32>
    %53 = math.rsqrt %52 : vector<16x1xf32>
    %54 = vector.broadcast %53 : vector<16x1xf32> to vector<16x32xf32>
    %55 = arith.mulf %47, %54 : vector<16x32xf32>
    %cst_24 = arith.constant 0.000000e+00 : f32
    %56 = vector.broadcast %cst_24 : f32 to vector<16x32xf32>
    %57 = arith.maximumf %55, %56 : vector<16x32xf32>
    %cst_25 = arith.constant dense<0.000000e+00> : vector<16xf32>
    %58 = vector.multi_reduction <add>, %57, %cst_25 [1] : vector<16x32xf32> to vector<16xf32>
    %59 = vector.shape_cast %58 : vector<16xf32> to vector<16x1xf32>
    %cst_26 = arith.constant 3.200000e+01 : f32
    %60 = vector.broadcast %cst_26 : f32 to vector<16x1xf32>
    %61 = arith.divf %59, %60 : vector<16x1xf32>
    %62 = vector.broadcast %61 : vector<16x1xf32> to vector<16x32xf32>
    %63 = arith.subf %57, %62 : vector<16x32xf32>
    %64 = arith.mulf %63, %63 : vector<16x32xf32>
    %cst_27 = arith.constant dense<0.000000e+00> : vector<16xf32>
    %65 = vector.multi_reduction <add>, %64, %cst_27 [1] : vector<16x32xf32> to vector<16xf32>
    %66 = vector.shape_cast %65 : vector<16xf32> to vector<16x1xf32>
    %cst_28 = arith.constant 3.200000e+01 : f32
    %67 = vector.broadcast %cst_28 : f32 to vector<16x1xf32>
    %68 = arith.divf %66, %67 : vector<16x1xf32>
    %69 = vector.broadcast %61 : vector<16x1xf32> to vector<16x32xf32>
    %70 = arith.subf %57, %69 : vector<16x32xf32>
    %cst_29 = arith.constant 9.99999974E-6 : f32
    %71 = vector.broadcast %cst_29 : f32 to vector<16x1xf32>
    %72 = arith.addf %68, %71 : vector<16x1xf32>
    %73 = math.rsqrt %72 : vector<16x1xf32>
    %74 = vector.broadcast %73 : vector<16x1xf32> to vector<16x32xf32>
    %75 = arith.mulf %70, %74 : vector<16x32xf32>
    %c0_30 = arith.constant 0 : index
    %c0_31 = arith.constant 0 : index
    %76 = vector.load %arg6[%c0_30, %c0_31] : memref<32x32xf32, #tpu.memory_space<vmem>>, vector<32x32xf32>
    %c0_32 = arith.constant 0 : index
    %c0_33 = arith.constant 0 : index
    %77 = vector.load %arg7[%c0_32, %c0_33] : memref<1x16xf32, #tpu.memory_space<vmem>>, vector<1x16xf32>
    %cst_34 = arith.constant dense<0.000000e+00> : vector<16x32xf32>
    %78 = tpu.matmul %75, %76, %cst_34 {dimension_numbers = #tpu.dot_dimension_numbers<[1], [0], [0], [1], [0, 0, 1, 1], [], []>} : vector<16x32xf32>, vector<32x32xf32>, vector<16x32xf32> -> vector<16x32xf32>
    %79 = vector.extract_strided_slice %78 {offsets = [0, 0], sizes = [16, 16], strides = [1, 1]} : vector<16x32xf32> to vector<16x16xf32>
    %80 = vector.extract_strided_slice %78 {offsets = [0, 16], sizes = [16, 16], strides = [1, 1]} : vector<16x32xf32> to vector<16x16xf32>
    %cst_35 = arith.constant dense<0.000000e+00> : vector<16x16xf32>
    %81 = tpu.matmul %0, %79, %cst_35 {dimension_numbers = #tpu.dot_dimension_numbers<[1], [0], [0], [1], [0, 0, 1, 1], [], []>} : vector<16x16xf32>, vector<16x16xf32>, vector<16x16xf32> -> vector<16x16xf32>
    %82 = arith.addf %81, %80 : vector<16x16xf32>
    %83 = vector.broadcast %77 : vector<1x16xf32> to vector<16x16xf32>
    %84 = arith.addf %82, %83 : vector<16x16xf32>
    %85 = arith.mulf %84, %84 : vector<16x16xf32>
    %cst_36 = arith.constant dense<0.000000e+00> : vector<16xf32>
    %86 = vector.multi_reduction <add>, %85, %cst_36 [1] : vector<16x16xf32> to vector<16xf32>
    %87 = vector.shape_cast %86 : vector<16xf32> to vector<16x1xf32>
    %cst_37 = arith.constant 1.000000e-24 : f32
    %88 = vector.broadcast %cst_37 : f32 to vector<16x1xf32>
    %89 = arith.maximumf %87, %88 : vector<16x1xf32>
    %90 = math.rsqrt %89 : vector<16x1xf32>
    %91 = vector.broadcast %90 : vector<16x1xf32> to vector<16x16xf32>
    %92 = arith.mulf %84, %91 : vector<16x16xf32>
    %93 = tpu.concatenate %38, %75, %92 in 1 : vector<16x32xf32>, vector<16x32xf32>, vector<16x16xf32> -> vector<16x80xf32>
    %c0_38 = arith.constant 0 : index
    %c0_39 = arith.constant 0 : index
    %94 = vector.load %arg8[%c0_38, %c0_39] : memref<80x4xf32, #tpu.memory_space<vmem>>, vector<80x4xf32>
    %cst_40 = arith.constant dense<0.000000e+00> : vector<16x4xf32>
    %95 = tpu.matmul %93, %94, %cst_40 {dimension_numbers = #tpu.dot_dimension_numbers<[1], [0], [0], [1], [0, 0, 1, 1], [], []>} : vector<16x80xf32>, vector<80x4xf32>, vector<16x4xf32> -> vector<16x4xf32>
    %c0_41 = arith.constant 0 : index
    %c0_42 = arith.constant 0 : index
    %96 = vector.load %arg9[%c0_41, %c0_42] : memref<1x4xf32, #tpu.memory_space<vmem>>, vector<1x4xf32>
    %97 = vector.broadcast %96 : vector<1x4xf32> to vector<16x4xf32>
    %98 = arith.addf %95, %97 : vector<16x4xf32>
    %cst_43 = arith.constant dense<0xFF800000> : vector<16xf32>
    %99 = vector.multi_reduction <maximumf>, %98, %cst_43 [1] : vector<16x4xf32> to vector<16xf32>
    %100 = vector.shape_cast %99 : vector<16xf32> to vector<16x1xf32>
    %101 = vector.broadcast %100 : vector<16x1xf32> to vector<16x4xf32>
    %102 = arith.subf %98, %101 : vector<16x4xf32>
    %103 = math.exp %102 : vector<16x4xf32>
    %cst_44 = arith.constant dense<0.000000e+00> : vector<16xf32>
    %104 = vector.multi_reduction <add>, %103, %cst_44 [1] : vector<16x4xf32> to vector<16xf32>
    %105 = vector.shape_cast %104 : vector<16xf32> to vector<16x1xf32>
    %106 = math.log %105 : vector<16x1xf32>
    %107 = vector.broadcast %106 : vector<16x1xf32> to vector<16x4xf32>
    %108 = arith.subf %102, %107 : vector<16x4xf32>
    %c0_45 = arith.constant 0 : index
    %c0_46 = arith.constant 0 : index
    %109 = vector.load %arg10[%c0_45, %c0_46] : memref<16x4xf32, #tpu.memory_space<vmem>>, vector<16x4xf32>
    tpu.vector_store %arg10[%c0_45, %c0_46], %108 {strides = array<i32>} : memref<16x4xf32, #tpu.memory_space<vmem>>, vector<16x4xf32>,
    return
  }
}

</mosaic_0001>

<llo_original>
// kernel: tpu_custom_call.1
$region0: #{tpu_custom_call.1}
  #allocation0 [shape = 'u32[]', space=smem, size = 0x4, offset = 0x4, fixed_abs, tag = 'smem constant byte address 0x4 - core index']
  #allocation1 [shape = 'u32[144,128]{1,0:T(1,128)}', space=vmem, size = 0x12000, scoped, tag = 'internal scratch']
  %s0 = inlined_call_operand.hbm [shape: f32[16,16], index: 0, kind: input, shape index: {}]
  %s1 = inlined_call_operand.hbm [shape: f32[16,8], index: 1, kind: input, shape index: {}]
  %s2 = inlined_call_operand.hbm [shape: f32[8,64], index: 2, kind: input, shape index: {}]
  %s3 = inlined_call_operand.hbm [shape: f32[1,32], index: 3, kind: input, shape index: {}]
  %s4 = inlined_call_operand.hbm [shape: f32[32,64], index: 4, kind: input, shape index: {}]
  %s5 = inlined_call_operand.hbm [shape: f32[1,32], index: 5, kind: input, shape index: {}]
  %s6 = inlined_call_operand.hbm [shape: f32[32,32], index: 6, kind: input, shape index: {}]
  %s7 = inlined_call_operand.hbm [shape: f32[1,16], index: 7, kind: input, shape index: {}]
  %s8 = inlined_call_operand.hbm [shape: f32[80,4], index: 8, kind: input, shape index: {}]
  %s9 = inlined_call_operand.hbm [shape: f32[1,4], index: 9, kind: input, shape index: {}]
  %s10 = inlined_call_operand.hbm [shape: f32[16,4], index: 10, kind: output, shape index: {}]
  %s11 = sld [smem:[#allocation0]]
  $region90: #{tpu_custom_call.1} parent=0
    _
  %s13 = ssub.s32 1, %s11
  %s14 = scalar_select 0, %s13, %s11
  $region1: #{tpu_custom_call.1} parent=0
    #allocation2 [shape = 'u8[8192]{0}', space=vmem, size = 0x2000, scoped, tag = 'input window, operand 0, single buffered']
    #allocation3 [shape = 's32[1]{0}', space=sflag, size = 0x4, scoped, tag = 'scoped memory for tpu_custom_call.1']
    #allocation4 [shape = 's32[1]{0}', space=sflag, size = 0x4, scoped, tag = 'scoped memory for tpu_custom_call.1']
    #allocation5 [shape = 'u8[8192]{0}', space=vmem, size = 0x2000, scoped, tag = 'input window, operand 1, single buffered']
    #allocation6 [shape = 's32[1]{0}', space=sflag, size = 0x4, scoped, tag = 'scoped memory for tpu_custom_call.1']
    #allocation7 [shape = 'u8[4096]{0}', space=vmem, size = 0x1000, scoped, tag = 'input window, operand 2, single buffered']
    #allocation8 [shape = 'u8[512]{0}', space=vmem, size = 0x400, scoped, tag = 'input window, operand 3, single buffered']
    #allocation9 [shape = 's32[1]{0}', space=sflag, size = 0x4, scoped, tag = 'scoped memory for tpu_custom_call.1']
    #allocation10 [shape = 'u8[16384]{0}', space=vmem, size = 0x4000, scoped, tag = 'input window, operand 4, single buffered']
    #allocation11 [shape = 'u8[512]{0}', space=vmem, size = 0x400, scoped, tag = 'input window, operand 5, single buffered']
    #allocation12 [shape = 's32[1]{0}', space=sflag, size = 0x4, scoped, tag = 'scoped memory for tpu_custom_call.1']
    #allocation13 [shape = 'u8[16384]{0}', space=vmem, size = 0x4000, scoped, tag = 'input window, operand 6, single buffered']
    #allocation14 [shape = 'u8[512]{0}', space=vmem, size = 0x400, scoped, tag = 'input window, operand 7, single buffered']
    #allocation15 [shape = 's32[1]{0}', space=sflag, size = 0x4, scoped, tag = 'scoped memory for tpu_custom_call.1']
    #allocation16 [shape = 'u8[40960]{0}', space=vmem, size = 0xa000, scoped, tag = 'input window, operand 8, single buffered']
    #allocation17 [shape = 'u8[512]{0}', space=vmem, size = 0x400, scoped, tag = 'input window, operand 9, single buffered']
    #allocation18 [shape = 's32[1]{0}', space=sflag, size = 0x4, scoped, tag = 'scoped memory for tpu_custom_call.1']
    #allocation19 [shape = 'u8[8192]{0}', space=vmem, size = 0x2000, scoped, tag = 'output window, operand 0, single buffered']
    %15 = vsyncpa [#allocation3], 0
    %16 = vsyncpa [#allocation6], 0
    %17 = vsyncpa [#allocation9], 0
    %18 = vsyncpa [#allocation12], 0
    %19 = vsyncpa [#allocation15], 0
    %20 = vsyncpa [#allocation18], 0
    %21 = vsyncpa [#allocation4], 0
    // Predicated region
    $region2: #{tpu_custom_call.1} parent=1 // pred_check
      _
    $region3: #{tpu_custom_call.1} parent=1 // pred_check_branch
      %23 = sbr.rel (0) target = $region5
    $region4: #{tpu_custom_call.1} parent=1 // pred_region
      %s25 = ssub.s32 256, 256
      %26 = vsyncadd [#allocation3], %s25
      %s27 = sshll.u32 [#allocation2], 4
      %s28 = int_to_ptr.vmem [resolvable:$true] %s27
      %33 = dma.hbm_to_vmem [thread:$0]  %s0, 256, %s28, [#allocation3], 128, 128, 8
    $region5: #{tpu_custom_call.1} parent=1 // pred_fallthru
      _
    // Predicated region
    $region6: #{tpu_custom_call.1} parent=1 // pred_check
      _
    $region7: #{tpu_custom_call.1} parent=1 // pred_check_branch
      %35 = sbr.rel (0) target = $region9
    $region8: #{tpu_custom_call.1} parent=1 // pred_region
      %s37 = ssub.s32 256, 256
      %38 = vsyncadd [#allocation6], %s37
      %s39 = sshll.u32 [#allocation5], 4
      %s40 = int_to_ptr.vmem [resolvable:$true] %s39
      %45 = dma.hbm_to_vmem [thread:$0]  %s1, 256, %s40, [#allocation6], 128, 128, 8
    $region9: #{tpu_custom_call.1} parent=1 // pred_fallthru
      _
    // Predicated region
    $region10: #{tpu_custom_call.1} parent=1 // pred_check
      _
    $region11: #{tpu_custom_call.1} parent=1 // pred_check_branch
      %47 = sbr.rel (0) target = $region13
    $region12: #{tpu_custom_call.1} parent=1 // pred_region
      %s49 = ssub.s32 128, 128
      %50 = vsyncadd [#allocation6], %s49
      %s52 = sshll.u32 [#allocation7], 4
      %s53 = int_to_ptr.vmem [resolvable:$true] %s52
      %55 = dma.hbm_to_vmem [thread:$0]  %s2, 128, %s53, [#allocation6]
    $region13: #{tpu_custom_call.1} parent=1 // pred_fallthru
      _
    // Predicated region
    $region14: #{tpu_custom_call.1} parent=1 // pred_check
      _
    $region15: #{tpu_custom_call.1} parent=1 // pred_check_branch
      %57 = sbr.rel (0) target = $region17
    $region16: #{tpu_custom_call.1} parent=1 // pred_region
      %s59 = ssub.s32 16, 16
      %60 = vsyncadd [#allocation9], %s59
      %s62 = sshll.u32 [#allocation8], 4
      %s63 = int_to_ptr.vmem [resolvable:$true] %s62
      %65 = dma.hbm_to_vmem [thread:$0]  %s3, 16, %s63, [#allocation9]
    $region17: #{tpu_custom_call.1} parent=1 // pred_fallthru
      _
    // Predicated region
    $region18: #{tpu_custom_call.1} parent=1 // pred_check
      _
    $region19: #{tpu_custom_call.1} parent=1 // pred_check_branch
      %67 = sbr.rel (0) target = $region21
    $region20: #{tpu_custom_call.1} parent=1 // pred_region
      %s69 = ssub.s32 512, 512
      %70 = vsyncadd [#allocation9], %s69
      %s71 = sshll.u32 [#allocation10], 4
      %s72 = int_to_ptr.vmem [resolvable:$true] %s71
      %77 = dma.hbm_to_vmem [thread:$0]  %s4, 512, %s72, [#allocation9], 128, 128, 8
    $region21: #{tpu_custom_call.1} parent=1 // pred_fallthru
      _
    // Predicated region
    $region22: #{tpu_custom_call.1} parent=1 // pred_check
      _
    $region23: #{tpu_custom_call.1} parent=1 // pred_check_branch
      %79 = sbr.rel (0) target = $region25
    $region24: #{tpu_custom_call.1} parent=1 // pred_region
      %s81 = ssub.s32 16, 16
      %82 = vsyncadd [#allocation12], %s81
      %s84 = sshll.u32 [#allocation11], 4
      %s85 = int_to_ptr.vmem [resolvable:$true] %s84
      %87 = dma.hbm_to_vmem [thread:$0]  %s5, 16, %s85, [#allocation12]
    $region25: #{tpu_custom_call.1} parent=1 // pred_fallthru
      _
    // Predicated region
    $region26: #{tpu_custom_call.1} parent=1 // pred_check
      _
    $region27: #{tpu_custom_call.1} parent=1 // pred_check_branch
      %89 = sbr.rel (0) target = $region29
    $region28: #{tpu_custom_call.1} parent=1 // pred_region
      %s91 = ssub.s32 512, 512
      %92 = vsyncadd [#allocation12], %s91
      %s93 = sshll.u32 [#allocation13], 4
      %s94 = int_to_ptr.vmem [resolvable:$true] %s93
      %99 = dma.hbm_to_vmem [thread:$0]  %s6, 512, %s94, [#allocation12], 128, 128, 8
    $region29: #{tpu_custom_call.1} parent=1 // pred_fallthru
      _
    // Predicated region
    $region30: #{tpu_custom_call.1} parent=1 // pred_check
      _
    $region31: #{tpu_custom_call.1} parent=1 // pred_check_branch
      %101 = sbr.rel (0) target = $region33
    $region32: #{tpu_custom_call.1} parent=1 // pred_region
      %s103 = ssub.s32 16, 16
      %104 = vsyncadd [#allocation15], %s103
      %s106 = sshll.u32 [#allocation14], 4
      %s107 = int_to_ptr.vmem [resolvable:$true] %s106
      %109 = dma.hbm_to_vmem [thread:$0]  %s7, 16, %s107, [#allocation15]
    $region33: #{tpu_custom_call.1} parent=1 // pred_fallthru
      _
    // Predicated region
    $region34: #{tpu_custom_call.1} parent=1 // pred_check
      _
    $region35: #{tpu_custom_call.1} parent=1 // pred_check_branch
      %111 = sbr.rel (0) target = $region37
    $region36: #{tpu_custom_call.1} parent=1 // pred_region
      %s113 = ssub.s32 1280, 1280
      %114 = vsyncadd [#allocation15], %s113
      %s115 = sshll.u32 [#allocation16], 4
      %s116 = int_to_ptr.vmem [resolvable:$true] %s115
      %121 = dma.hbm_to_vmem [thread:$0]  %s8, 1280, %s116, [#allocation15], 128, 128, 8
    $region37: #{tpu_custom_call.1} parent=1 // pred_fallthru
      _
    // Predicated region
    $region38: #{tpu_custom_call.1} parent=1 // pred_check
      _
    $region39: #{tpu_custom_call.1} parent=1 // pred_check_branch
      %123 = sbr.rel (0) target = $region41
    $region40: #{tpu_custom_call.1} parent=1 // pred_region
      %s125 = ssub.s32 16, 16
      %126 = vsyncadd [#allocation18], %s125
      %s128 = sshll.u32 [#allocation17], 4
      %s129 = int_to_ptr.vmem [resolvable:$true] %s128
      %131 = dma.hbm_to_vmem [thread:$0]  %s9, 16, %s129, [#allocation18]
    $region41: #{tpu_custom_call.1} parent=1 // pred_fallthru
      _
    // Predicated region
    $region42: #{tpu_custom_call.1} parent=1 // pred_check
      _
    $region43: #{tpu_custom_call.1} parent=1 // pred_check_branch
      %133 = sbr.rel (0) target = $region45
    $region44: #{tpu_custom_call.1} parent=1 // pred_region
      %134 = dma.done [#allocation3], 256
    $region45: #{tpu_custom_call.1} parent=1 // pred_fallthru
      _
    // Predicated region
    $region46: #{tpu_custom_call.1} parent=1 // pred_check
      _
    $region47: #{tpu_custom_call.1} parent=1 // pred_check_branch
      %136 = sbr.rel (0) target = $region49
    $region48: #{tpu_custom_call.1} parent=1 // pred_region
      %137 = dma.done [#allocation6], 256
    $region49: #{tpu_custom_call.1} parent=1 // pred_fallthru
      _
    // Predicated region
    $region50: #{tpu_custom_call.1} parent=1 // pred_check
      _
    $region51: #{tpu_custom_call.1} parent=1 // pred_check_branch
      %139 = sbr.rel (0) target = $region53
    $region52: #{tpu_custom_call.1} parent=1 // pred_region
      %140 = dma.done [#allocation6], 128
    $region53: #{tpu_custom_call.1} parent=1 // pred_fallthru
      _
    // Predicated region
    $region54: #{tpu_custom_call.1} parent=1 // pred_check
      _
    $region55: #{tpu_custom_call.1} parent=1 // pred_check_branch
      %142 = sbr.rel (0) target = $region57
    $region56: #{tpu_custom_call.1} parent=1 // pred_region
      %143 = dma.done [#allocation9], 16
    $region57: #{tpu_custom_call.1} parent=1 // pred_fallthru
      _
    // Predicated region
    $region58: #{tpu_custom_call.1} parent=1 // pred_check
      _
    $region59: #{tpu_custom_call.1} parent=1 // pred_check_branch
      %145 = sbr.rel (0) target = $region61
    $region60: #{tpu_custom_call.1} parent=1 // pred_region
      %146 = dma.done [#allocation9], 512
    $region61: #{tpu_custom_call.1} parent=1 // pred_fallthru
      _
    // Predicated region
    $region62: #{tpu_custom_call.1} parent=1 // pred_check
      _
    $region63: #{tpu_custom_call.1} parent=1 // pred_check_branch
      %148 = sbr.rel (0) target = $region65
    $region64: #{tpu_custom_call.1} parent=1 // pred_region
      %149 = dma.done [#allocation12], 16
    $region65: #{tpu_custom_call.1} parent=1 // pred_fallthru
      _
    // Predicated region
    $region66: #{tpu_custom_call.1} parent=1 // pred_check
      _
    $region67: #{tpu_custom_call.1} parent=1 // pred_check_branch
      %151 = sbr.rel (0) target = $region69
    $region68: #{tpu_custom_call.1} parent=1 // pred_region
      %152 = dma.done [#allocation12], 512
    $region69: #{tpu_custom_call.1} parent=1 // pred_fallthru
      _
    // Predicated region
    $region70: #{tpu_custom_call.1} parent=1 // pred_check
      _
    $region71: #{tpu_custom_call.1} parent=1 // pred_check_branch
      %154 = sbr.rel (0) target = $region73
    $region72: #{tpu_custom_call.1} parent=1 // pred_region
      %155 = dma.done [#allocation15], 16
    $region73: #{tpu_custom_call.1} parent=1 // pred_fallthru
      _
    // Predicated region
    $region74: #{tpu_custom_call.1} parent=1 // pred_check
      _
    $region75: #{tpu_custom_call.1} parent=1 // pred_check_branch
      %157 = sbr.rel (0) target = $region77
    $region76: #{tpu_custom_call.1} parent=1 // pred_region
      %158 = dma.done [#allocation15], 1280
    $region77: #{tpu_custom_call.1} parent=1 // pred_fallthru
      _
    // Predicated region
    $region78: #{tpu_custom_call.1} parent=1 // pred_check
      _
    $region79: #{tpu_custom_call.1} parent=1 // pred_check_branch
      %160 = sbr.rel (0) target = $region81
    $region80: #{tpu_custom_call.1} parent=1 // pred_region
      %161 = dma.done [#allocation18], 16
    $region81: #{tpu_custom_call.1} parent=1 // pred_fallthru
      _
    %v162 = vld [vmem:[#allocation2] sm:$0xff]
    %v163 = vld [vmem:[#allocation2 + $0x8] sm:$0xff]
    %v164 = vld [vmem:[#allocation5] sm:$0xff]
    %v165 = vld [vmem:[#allocation5 + $0x8] sm:$0xff]
    %v166 = vld [vmem:[#allocation7] sm:$0xff]
    %v167 = vld [vmem:[#allocation8] sm:$0x1]
    %vm168 = vcmask 64512
    %v170 = vsel %vm168, %v164, 0
    %v173 = vsel %vm168, %v165, 0
    %175 = vmatprep.subr.mxu0 0.0
    %176 = vmatpush1.msra.mxu0 %v166
    %177 = vmatprep.subr.mxu0 0.0
    %178 = vmatpush1.msra.mxu0 0.0
    %179 = vmatprep.subr.mxu0 0.0
    %180 = vmatpush1.msra.mxu0 0.0
    %181 = vmatprep.subr.mxu0 0.0
    %182 = vmatpush1.msra.mxu0 0.0
    %183 = vmatprep.subr.mxu0 0.0
    %184 = vmatpush1.msra.mxu0 0.0
    %185 = vmatprep.subr.mxu0 0.0
    %186 = vmatpush1.msra.mxu0 0.0
    %187 = vmatprep.subr.mxu0 0.0
    %188 = vmatpush1.msra.mxu0 0.0
    %189 = vmatprep.subr.mxu0 0.0
    %190 = vmatpush1.msra.mxu0 0.0
    %191 = vmatprep.subr.mxu0 0.0
    %192 = vmatpush1.msra.mxu0 0.0
    %193 = vmatprep.subr.mxu0 0.0
    %194 = vmatpush1.msra.mxu0 0.0
    %195 = vmatprep.subr.mxu0 0.0
    %196 = vmatpush1.msra.mxu0 0.0
    %197 = vmatprep.subr.mxu0 0.0
    %198 = vmatpush1.msra.mxu0 0.0
    %199 = vmatprep.subr.mxu0 0.0
    %200 = vmatpush1.msra.mxu0 0.0
    %201 = vmatprep.subr.mxu0 0.0
    %202 = vmatpush1.msra.mxu0 0.0
    %203 = vmatprep.subr.mxu0 0.0
    %204 = vmatpush1.msra.mxu0 0.0
    %205 = vmatprep.subr.mxu0 0.0
    %206 = vmatpush1.msra.mxu0 0.0
    %207 = vmatprep.subr.mxu0 0.0
    %208 = vmatpush1.msra.mxu0 0.0
    %209 = vmatprep.subr.mxu0 0.0
    %210 = vmatpush1.msra.mxu0 0.0
    %211 = vmatprep.subr.mxu0 0.0
    %212 = vmatpush1.msra.mxu0 0.0
    %213 = vmatprep.subr.mxu0 0.0
    %214 = vmatpush1.msra.mxu0 0.0
    %215 = vmatprep.subr.mxu0 0.0
    %216 = vmatpush1.msra.mxu0 0.0
    %217 = vmatprep.subr.mxu0 0.0
    %218 = vmatpush1.msra.mxu0 0.0
    %219 = vmatprep.subr.mxu0 0.0
    %220 = vmatpush1.msra.mxu0 0.0
    %221 = vmatprep.subr.mxu0 0.0
    %222 = vmatpush1.msra.mxu0 0.0
    %223 = vmatprep.subr.mxu0 0.0
    %224 = vmatpush1.msra.mxu0 0.0
    %225 = vmatprep.subr.mxu0 0.0
    %226 = vmatpush1.msra.mxu0 0.0
    %227 = vmatprep.subr.mxu0 0.0
    %228 = vmatpush1.msra.mxu0 0.0
    %229 = vmatprep.subr.mxu0 0.0
    %230 = vmatpush1.msra.mxu0 0.0
    %231 = vmatprep.subr.mxu0 0.0
    %232 = vmatpush1.msra.mxu0 0.0
    %233 = vmatprep.subr.mxu0 0.0
    %234 = vmatpush1.msra.mxu0 0.0
    %235 = vmatprep.subr.mxu0 0.0
    %236 = vmatpush1.msra.mxu0 0.0
    %237 = vmatprep.subr.mxu0 0.0
    %238 = vmatpush1.msra.mxu0 0.0
    %239 = vmatprep.mubr.f32.mxu0 0.0
    %240 = vmatmul.mubr.f32.gmra.mrb[0].mxu0 %v170
    %v241 = vpop.f32.mrb[0].mxu0
    %v242 = vadd.f32 0.0, %v241
    %v243 = vpop.f32.mrb[0].mxu0
    %244 = vmatprep.mubr.f32.mxu0 0.0
    %245 = vmatmul.mubr.f32.gmra.mrb[0].mxu0 %v173
    %v246 = vpop.f32.mrb[0].mxu0
    %v247 = vadd.f32 0.0, %v246
    %v248 = vpop.f32.mrb[0].mxu0
    %249 = vdwg.mxu0
    %252 = vrot.lane.b32.xlu0 %v242, 96
    %v253 = vpop.permute.xlu0 %252
    %254 = vrot.lane.b32.xlu0 %v247, 96
    %v255 = vpop.permute.xlu0 %254
    %vm258 = vcmask 130048
    %v260 = vsel %vm258, %v162, 0
    %v263 = vsel %vm258, %v163, 0
    %265 = vmatprep.subr.mxu0 0.0
    %266 = vmatpush1.msra.mxu0 %v242
    %267 = vmatprep.subr.mxu0 0.0
    %268 = vmatpush1.msra.mxu0 %v247
    %269 = vmatprep.subr.mxu0 0.0
    %270 = vmatpush1.msra.mxu0 0.0
    %271 = vmatprep.subr.mxu0 0.0
    %272 = vmatpush1.msra.mxu0 0.0
    %273 = vmatprep.subr.mxu0 0.0
    %274 = vmatpush1.msra.mxu0 0.0
    %275 = vmatprep.subr.mxu0 0.0
    %276 = vmatpush1.msra.mxu0 0.0
    %277 = vmatprep.subr.mxu0 0.0
    %278 = vmatpush1.msra.mxu0 0.0
    %279 = vmatprep.subr.mxu0 0.0
    %280 = vmatpush1.msra.mxu0 0.0
    %281 = vmatprep.subr.mxu0 0.0
    %282 = vmatpush1.msra.mxu0 0.0
    %283 = vmatprep.subr.mxu0 0.0
    %284 = vmatpush1.msra.mxu0 0.0
    %285 = vmatprep.subr.mxu0 0.0
    %286 = vmatpush1.msra.mxu0 0.0
    %287 = vmatprep.subr.mxu0 0.0
    %288 = vmatpush1.msra.mxu0 0.0
    %289 = vmatprep.subr.mxu0 0.0
    %290 = vmatpush1.msra.mxu0 0.0
    %291 = vmatprep.subr.mxu0 0.0
    %292 = vmatpush1.msra.mxu0 0.0
    %293 = vmatprep.subr.mxu0 0.0
    %294 = vmatpush1.msra.mxu0 0.0
    %295 = vmatprep.subr.mxu0 0.0
    %296 = vmatpush1.msra.mxu0 0.0
    %297 = vmatprep.subr.mxu0 0.0
    %298 = vmatpush1.msra.mxu0 0.0
    %299 = vmatprep.subr.mxu0 0.0
    %300 = vmatpush1.msra.mxu0 0.0
    %301 = vmatprep.subr.mxu0 0.0
    %302 = vmatpush1.msra.mxu0 0.0
    %303 = vmatprep.subr.mxu0 0.0
    %304 = vmatpush1.msra.mxu0 0.0
    %305 = vmatprep.subr.mxu0 0.0
    %306 = vmatpush1.msra.mxu0 0.0
    %307 = vmatprep.subr.mxu0 0.0
    %308 = vmatpush1.msra.mxu0 0.0
    %309 = vmatprep.subr.mxu0 0.0
    %310 = vmatpush1.msra.mxu0 0.0
    %311 = vmatprep.subr.mxu0 0.0
    %312 = vmatpush1.msra.mxu0 0.0
    %313 = vmatprep.subr.mxu0 0.0
    %314 = vmatpush1.msra.mxu0 0.0
    %315 = vmatprep.subr.mxu0 0.0
    %316 = vmatpush1.msra.mxu0 0.0
    %317 = vmatprep.subr.mxu0 0.0
    %318 = vmatpush1.msra.mxu0 0.0
    %319 = vmatprep.subr.mxu0 0.0
    %320 = vmatpush1.msra.mxu0 0.0
    %321 = vmatprep.subr.mxu0 0.0
    %322 = vmatpush1.msra.mxu0 0.0
    %323 = vmatprep.subr.mxu0 0.0
    %324 = vmatpush1.msra.mxu0 0.0
    %325 = vmatprep.subr.mxu0 0.0
    %326 = vmatpush1.msra.mxu0 0.0
    %327 = vmatprep.subr.mxu0 0.0
    %328 = vmatpush1.msra.mxu0 0.0
    %329 = vmatprep.mubr.f32.mxu0 0.0
    %330 = vmatmul.mubr.f32.gmra.mrb[0].mxu0 %v260
    %v331 = vpop.f32.mrb[0].mxu0
    %v332 = vadd.f32 %v253, %v331
    %v333 = vpop.f32.mrb[0].mxu0
    %334 = vmatprep.mubr.f32.mxu0 0.0
    %335 = vmatmul.mubr.f32.gmra.mrb[0].mxu0 %v263
    %v336 = vpop.f32.mrb[0].mxu0
    %v337 = vadd.f32 %v255, %v336
    %v338 = vpop.f32.mrb[0].mxu0
    %339 = vdwg.mxu0
    %v341 = vlaneseq
    %v342 = vshrl.u32 %v341, 7
    %v343 = vsub.s32 0, %v342
    %v344 = vrot.slane %v167, %v343
    %v346 = vadd.f32 %v332, %v344
    %v347 = vadd.f32 %v337, %v344
    %v348 = vmul.f32 %v346, %v346
    %v349 = vmul.f32 %v347, %v347
    %vm350 = vcmask 261120
    %v351 = vsel %vm350, %v348, 0.0
    %352 = vadd.xlane.f32.xlu0 %v351
    %v353 = vpop.xlane.xlu0 %352
    %v354 = vsel %vm350, %v349, 0.0
    %355 = vadd.xlane.f32.xlu0 %v354
    %v356 = vpop.xlane.xlu0 %355
    %v357 = vmax.f32 %v353, 1e-24
    %v358 = vmax.f32 %v356, 1e-24
    %v359 = vrsqrt.pop %v357
    %v360 = vrsqrt.pop %v358
    %v361 = vmul.f32 %v346, %v359
    %v362 = vmul.f32 %v347, %v360
    %v363 = vmax.f32 %v361, 0.0
    %v364 = vmax.f32 %v362, 0.0
    %v365 = vsel %vm350, %v363, 0.0
    %366 = vadd.xlane.f32.xlu0 %v365
    %v367 = vpop.xlane.xlu0 %366
    %v368 = vsel %vm350, %v364, 0.0
    %369 = vadd.xlane.f32.xlu0 %v368
    %v370 = vpop.xlane.xlu0 %369
    %v371 = vrcp.pop 32.0
    %v372 = vmul.f32 %v367, %v371
    %v373 = vmul.f32 %v370, %v371
    %v374 = vsub.f32 %v363, %v372
    %v375 = vsub.f32 %v364, %v373
    %v376 = vmul.f32 %v374, %v374
    %v377 = vmul.f32 %v375, %v375
    %v378 = vsel %vm350, %v376, 0.0
    %379 = vadd.xlane.f32.xlu0 %v378
    %v380 = vpop.xlane.xlu0 %379
    %v381 = vsel %vm350, %v377, 0.0
    %382 = vadd.xlane.f32.xlu0 %v381
    %v383 = vpop.xlane.xlu0 %382
    %v384 = vmul.f32 %v380, %v371
    %v385 = vmul.f32 %v383, %v371
    %v386 = vadd.f32 %v384, 1e-05
    %v387 = vadd.f32 %v385, 1e-05
    %v388 = vrsqrt.pop %v386
    %v389 = vrsqrt.pop %v387
    %v390 = vmul.f32 %v374, %v388
    %v391 = vmul.f32 %v375, %v389
    %v392 = vld [vmem:[#allocation10] sm:$0xff]
    %v393 = vld [vmem:[#allocation10 + $0x8] sm:$0xff]
    %v394 = vld [vmem:[#allocation10 + $0x10] sm:$0xff]
    %v395 = vld [vmem:[#allocation10 + $0x18] sm:$0xff]
    %v396 = vld [vmem:[#allocation11] sm:$0x1]
    %v398 = vsel %vm350, %v390, 0
    %v401 = vsel %vm350, %v391, 0
    %403 = vmatprep.subr.mxu0 0.0
    %404 = vmatpush1.msra.mxu0 %v392
    %405 = vmatprep.subr.mxu0 0.0
    %406 = vmatpush1.msra.mxu0 %v393
    %407 = vmatprep.subr.mxu0 0.0
    %408 = vmatpush1.msra.mxu0 %v394
    %409 = vmatprep.subr.mxu0 0.0
    %410 = vmatpush1.msra.mxu0 %v395
    %411 = vmatprep.subr.mxu0 0.0
    %412 = vmatpush1.msra.mxu0 0.0
    %413 = vmatprep.subr.mxu0 0.0
    %414 = vmatpush1.msra.mxu0 0.0
    %415 = vmatprep.subr.mxu0 0.0
    %416 = vmatpush1.msra.mxu0 0.0
    %417 = vmatprep.subr.mxu0 0.0
    %418 = vmatpush1.msra.mxu0 0.0
    %419 = vmatprep.subr.mxu0 0.0
    %420 = vmatpush1.msra.mxu0 0.0
    %421 = vmatprep.subr.mxu0 0.0
    %422 = vmatpush1.msra.mxu0 0.0
    %423 = vmatprep.subr.mxu0 0.0
    %424 = vmatpush1.msra.mxu0 0.0
    %425 = vmatprep.subr.mxu0 0.0
    %426 = vmatpush1.msra.mxu0 0.0
    %427 = vmatprep.subr.mxu0 0.0
    %428 = vmatpush1.msra.mxu0 0.0
    %429 = vmatprep.subr.mxu0 0.0
    %430 = vmatpush1.msra.mxu0 0.0
    %431 = vmatprep.subr.mxu0 0.0
    %432 = vmatpush1.msra.mxu0 0.0
    %433 = vmatprep.subr.mxu0 0.0
    %434 = vmatpush1.msra.mxu0 0.0
    %435 = vmatprep.subr.mxu0 0.0
    %436 = vmatpush1.msra.mxu0 0.0
    %437 = vmatprep.subr.mxu0 0.0
    %438 = vmatpush1.msra.mxu0 0.0
    %439 = vmatprep.subr.mxu0 0.0
    %440 = vmatpush1.msra.mxu0 0.0
    %441 = vmatprep.subr.mxu0 0.0
    %442 = vmatpush1.msra.mxu0 0.0
    %443 = vmatprep.subr.mxu0 0.0
    %444 = vmatpush1.msra.mxu0 0.0
    %445 = vmatprep.subr.mxu0 0.0
    %446 = vmatpush1.msra.mxu0 0.0
    %447 = vmatprep.subr.mxu0 0.0
    %448 = vmatpush1.msra.mxu0 0.0
    %449 = vmatprep.subr.mxu0 0.0
    %450 = vmatpush1.msra.mxu0 0.0
    %451 = vmatprep.subr.mxu0 0.0
    %452 = vmatpush1.msra.mxu0 0.0
    %453 = vmatprep.subr.mxu0 0.0
    %454 = vmatpush1.msra.mxu0 0.0
    %455 = vmatprep.subr.mxu0 0.0
    %456 = vmatpush1.msra.mxu0 0.0
    %457 = vmatprep.subr.mxu0 0.0
    %458 = vmatpush1.msra.mxu0 0.0
    %459 = vmatprep.subr.mxu0 0.0
    %460 = vmatpush1.msra.mxu0 0.0
    %461 = vmatprep.subr.mxu0 0.0
    %462 = vmatpush1.msra.mxu0 0.0
    %463 = vmatprep.subr.mxu0 0.0
    %464 = vmatpush1.msra.mxu0 0.0
    %465 = vmatprep.subr.mxu0 0.0
    %466 = vmatpush1.msra.mxu0 0.0
    %467 = vmatprep.mubr.f32.mxu0 0.0
    %468 = vmatmul.mubr.f32.gmra.mrb[0].mxu0 %v398
    %v469 = vpop.f32.mrb[0].mxu0
    %v470 = vadd.f32 0.0, %v469
    %v471 = vpop.f32.mrb[0].mxu0
    %472 = vmatprep.mubr.f32.mxu0 0.0
    %473 = vmatmul.mubr.f32.gmra.mrb[0].mxu0 %v401
    %v474 = vpop.f32.mrb[0].mxu0
    %v475 = vadd.f32 0.0, %v474
    %v476 = vpop.f32.mrb[0].mxu0
    %477 = vdwg.mxu0
    %480 = vrot.lane.b32.xlu0 %v470, 96
    %v481 = vpop.permute.xlu0 %480
    %482 = vrot.lane.b32.xlu0 %v475, 96
    %v483 = vpop.permute.xlu0 %482
    %486 = vmatprep.subr.mxu0 0.0
    %487 = vmatpush1.msra.mxu0 %v470
    %488 = vmatprep.subr.mxu0 0.0
    %489 = vmatpush1.msra.mxu0 %v475
    %490 = vmatprep.subr.mxu0 0.0
    %491 = vmatpush1.msra.mxu0 0.0
    %492 = vmatprep.subr.mxu0 0.0
    %493 = vmatpush1.msra.mxu0 0.0
    %494 = vmatprep.subr.mxu0 0.0
    %495 = vmatpush1.msra.mxu0 0.0
    %496 = vmatprep.subr.mxu0 0.0
    %497 = vmatpush1.msra.mxu0 0.0
    %498 = vmatprep.subr.mxu0 0.0
    %499 = vmatpush1.msra.mxu0 0.0
    %500 = vmatprep.subr.mxu0 0.0
    %501 = vmatpush1.msra.mxu0 0.0
    %502 = vmatprep.subr.mxu0 0.0
    %503 = vmatpush1.msra.mxu0 0.0
    %504 = vmatprep.subr.mxu0 0.0
    %505 = vmatpush1.msra.mxu0 0.0
    %506 = vmatprep.subr.mxu0 0.0
    %507 = vmatpush1.msra.mxu0 0.0
    %508 = vmatprep.subr.mxu0 0.0
    %509 = vmatpush1.msra.mxu0 0.0
    %510 = vmatprep.subr.mxu0 0.0
    %511 = vmatpush1.msra.mxu0 0.0
    %512 = vmatprep.subr.mxu0 0.0
    %513 = vmatpush1.msra.mxu0 0.0
    %514 = vmatprep.subr.mxu0 0.0
    %515 = vmatpush1.msra.mxu0 0.0
    %516 = vmatprep.subr.mxu0 0.0
    %517 = vmatpush1.msra.mxu0 0.0
    %518 = vmatprep.subr.mxu0 0.0
    %519 = vmatpush1.msra.mxu0 0.0
    %520 = vmatprep.subr.mxu0 0.0
    %521 = vmatpush1.msra.mxu0 0.0
    %522 = vmatprep.subr.mxu0 0.0
    %523 = vmatpush1.msra.mxu0 0.0
    %524 = vmatprep.subr.mxu0 0.0
    %525 = vmatpush1.msra.mxu0 0.0
    %526 = vmatprep.subr.mxu0 0.0
    %527 = vmatpush1.msra.mxu0 0.0
    %528 = vmatprep.subr.mxu0 0.0
    %529 = vmatpush1.msra.mxu0 0.0
    %530 = vmatprep.subr.mxu0 0.0
    %531 = vmatpush1.msra.mxu0 0.0
    %532 = vmatprep.subr.mxu0 0.0
    %533 = vmatpush1.msra.mxu0 0.0
    %534 = vmatprep.subr.mxu0 0.0
    %535 = vmatpush1.msra.mxu0 0.0
    %536 = vmatprep.subr.mxu0 0.0
    %537 = vmatpush1.msra.mxu0 0.0
    %538 = vmatprep.subr.mxu0 0.0
    %539 = vmatpush1.msra.mxu0 0.0
    %540 = vmatprep.subr.mxu0 0.0
    %541 = vmatpush1.msra.mxu0 0.0
    %542 = vmatprep.subr.mxu0 0.0
    %543 = vmatpush1.msra.mxu0 0.0
    %544 = vmatprep.subr.mxu0 0.0
    %545 = vmatpush1.msra.mxu0 0.0
    %546 = vmatprep.subr.mxu0 0.0
    %547 = vmatpush1.msra.mxu0 0.0
    %548 = vmatprep.subr.mxu0 0.0
    %549 = vmatpush1.msra.mxu0 0.0
    %550 = vmatprep.mubr.f32.mxu0 0.0
    %551 = vmatmul.mubr.f32.gmra.mrb[0].mxu0 %v260
    %v552 = vpop.f32.mrb[0].mxu0
    %v553 = vadd.f32 %v481, %v552
    %v554 = vpop.f32.mrb[0].mxu0
    %555 = vmatprep.mubr.f32.mxu0 0.0
    %556 = vmatmul.mubr.f32.gmra.mrb[0].mxu0 %v263
    %v557 = vpop.f32.mrb[0].mxu0
    %v558 = vadd.f32 %v483, %v557
    %v559 = vpop.f32.mrb[0].mxu0
    %560 = vdwg.mxu0
    %v562 = vlaneseq
    %v563 = vshrl.u32 %v562, 7
    %v564 = vsub.s32 0, %v563
    %v565 = vrot.slane %v396, %v564
    %v567 = vadd.f32 %v553, %v565
    %v568 = vadd.f32 %v558, %v565
    %v569 = vmul.f32 %v567, %v567
    %v570 = vmul.f32 %v568, %v568
    %v571 = vsel %vm350, %v569, 0.0
    %572 = vadd.xlane.f32.xlu0 %v571
    %v573 = vpop.xlane.xlu0 %572
    %v574 = vsel %vm350, %v570, 0.0
    %575 = vadd.xlane.f32.xlu0 %v574
    %v576 = vpop.xlane.xlu0 %575
    %v577 = vmax.f32 %v573, 1e-24
    %v578 = vmax.f32 %v576, 1e-24
    %v579 = vrsqrt.pop %v577
    %v580 = vrsqrt.pop %v578
    %v581 = vmul.f32 %v567, %v579
    %v582 = vmul.f32 %v568, %v580
    %v583 = vmax.f32 %v581, 0.0
    %v584 = vmax.f32 %v582, 0.0
    %v585 = vsel %vm350, %v583, 0.0
    %586 = vadd.xlane.f32.xlu0 %v585
    %v587 = vpop.xlane.xlu0 %586
    %v588 = vsel %vm350, %v584, 0.0
    %589 = vadd.xlane.f32.xlu0 %v588
    %v590 = vpop.xlane.xlu0 %589
    %v591 = vmul.f32 %v587, %v371
    %v592 = vmul.f32 %v590, %v371
    %v593 = vsub.f32 %v583, %v591
    %v594 = vsub.f32 %v584, %v592
    %v595 = vmul.f32 %v593, %v593
    %v596 = vmul.f32 %v594, %v594
    %v597 = vsel %vm350, %v595, 0.0
    %598 = vadd.xlane.f32.xlu0 %v597
    %v599 = vpop.xlane.xlu0 %598
    %v600 = vsel %vm350, %v596, 0.0
    %601 = vadd.xlane.f32.xlu0 %v600
    %v602 = vpop.xlane.xlu0 %601
    %v603 = vmul.f32 %v599, %v371
    %v604 = vmul.f32 %v602, %v371
    %v605 = vadd.f32 %v603, 1e-05
    %v606 = vadd.f32 %v604, 1e-05
    %v607 = vrsqrt.pop %v605
    %v608 = vrsqrt.pop %v606
    %v609 = vmul.f32 %v593, %v607
    %v610 = vmul.f32 %v594, %v608
    %v611 = vld [vmem:[#allocation13] sm:$0xff]
    %v612 = vld [vmem:[#allocation13 + $0x8] sm:$0xff]
    %v613 = vld [vmem:[#allocation13 + $0x10] sm:$0xff]
    %v614 = vld [vmem:[#allocation13 + $0x18] sm:$0xff]
    %v615 = vld [vmem:[#allocation14] sm:$0x1]
    %v617 = vsel %vm350, %v609, 0
    %v620 = vsel %vm350, %v610, 0
    %622 = vmatprep.subr.mxu0 0.0
    %623 = vmatpush1.msra.mxu0 %v611
    %624 = vmatprep.subr.mxu0 0.0
    %625 = vmatpush1.msra.mxu0 %v612
    %626 = vmatprep.subr.mxu0 0.0
    %627 = vmatpush1.msra.mxu0 %v613
    %628 = vmatprep.subr.mxu0 0.0
    %629 = vmatpush1.msra.mxu0 %v614
    %630 = vmatprep.subr.mxu0 0.0
    %631 = vmatpush1.msra.mxu0 0.0
    %632 = vmatprep.subr.mxu0 0.0
    %633 = vmatpush1.msra.mxu0 0.0
    %634 = vmatprep.subr.mxu0 0.0
    %635 = vmatpush1.msra.mxu0 0.0
    %636 = vmatprep.subr.mxu0 0.0
    %637 = vmatpush1.msra.mxu0 0.0
    %638 = vmatprep.subr.mxu0 0.0
    %639 = vmatpush1.msra.mxu0 0.0
    %640 = vmatprep.subr.mxu0 0.0
    %641 = vmatpush1.msra.mxu0 0.0
    %642 = vmatprep.subr.mxu0 0.0
    %643 = vmatpush1.msra.mxu0 0.0
    %644 = vmatprep.subr.mxu0 0.0
    %645 = vmatpush1.msra.mxu0 0.0
    %646 = vmatprep.subr.mxu0 0.0
    %647 = vmatpush1.msra.mxu0 0.0
    %648 = vmatprep.subr.mxu0 0.0
    %649 = vmatpush1.msra.mxu0 0.0
    %650 = vmatprep.subr.mxu0 0.0
    %651 = vmatpush1.msra.mxu0 0.0
    %652 = vmatprep.subr.mxu0 0.0
    %653 = vmatpush1.msra.mxu0 0.0
    %654 = vmatprep.subr.mxu0 0.0
    %655 = vmatpush1.msra.mxu0 0.0
    %656 = vmatprep.subr.mxu0 0.0
    %657 = vmatpush1.msra.mxu0 0.0
    %658 = vmatprep.subr.mxu0 0.0
    %659 = vmatpush1.msra.mxu0 0.0
    %660 = vmatprep.subr.mxu0 0.0
    %661 = vmatpush1.msra.mxu0 0.0
    %662 = vmatprep.subr.mxu0 0.0
    %663 = vmatpush1.msra.mxu0 0.0
    %664 = vmatprep.subr.mxu0 0.0
    %665 = vmatpush1.msra.mxu0 0.0
    %666 = vmatprep.subr.mxu0 0.0
    %667 = vmatpush1.msra.mxu0 0.0
    %668 = vmatprep.subr.mxu0 0.0
    %669 = vmatpush1.msra.mxu0 0.0
    %670 = vmatprep.subr.mxu0 0.0
    %671 = vmatpush1.msra.mxu0 0.0
    %672 = vmatprep.subr.mxu0 0.0
    %673 = vmatpush1.msra.mxu0 0.0
    %674 = vmatprep.subr.mxu0 0.0
    %675 = vmatpush1.msra.mxu0 0.0
    %676 = vmatprep.subr.mxu0 0.0
    %677 = vmatpush1.msra.mxu0 0.0
    %678 = vmatprep.subr.mxu0 0.0
    %679 = vmatpush1.msra.mxu0 0.0
    %680 = vmatprep.subr.mxu0 0.0
    %681 = vmatpush1.msra.mxu0 0.0
    %682 = vmatprep.subr.mxu0 0.0
    %683 = vmatpush1.msra.mxu0 0.0
    %684 = vmatprep.subr.mxu0 0.0
    %685 = vmatpush1.msra.mxu0 0.0
    %686 = vmatprep.mubr.f32.mxu0 0.0
    %687 = vmatmul.mubr.f32.gmra.mrb[0].mxu0 %v617
    %v688 = vpop.f32.mrb[0].mxu0
    %v689 = vadd.f32 0.0, %v688
    %v690 = vpop.f32.mrb[0].mxu0
    %691 = vmatprep.mubr.f32.mxu0 0.0
    %692 = vmatmul.mubr.f32.gmra.mrb[0].mxu0 %v620
    %v693 = vpop.f32.mrb[0].mxu0
    %v694 = vadd.f32 0.0, %v693
    %v695 = vpop.f32.mrb[0].mxu0
    %696 = vdwg.mxu0
    %699 = vrot.lane.b32.xlu0 %v689, 112
    %v700 = vpop.permute.xlu0 %699
    %701 = vrot.lane.b32.xlu0 %v694, 112
    %v702 = vpop.permute.xlu0 %701
    %705 = vmatprep.subr.mxu0 0.0
    %706 = vmatpush1.msra.mxu0 %v689
    %707 = vmatprep.subr.mxu0 0.0
    %708 = vmatpush1.msra.mxu0 %v694
    %709 = vmatprep.subr.mxu0 0.0
    %710 = vmatpush1.msra.mxu0 0.0
    %711 = vmatprep.subr.mxu0 0.0
    %712 = vmatpush1.msra.mxu0 0.0
    %713 = vmatprep.subr.mxu0 0.0
    %714 = vmatpush1.msra.mxu0 0.0
    %715 = vmatprep.subr.mxu0 0.0
    %716 = vmatpush1.msra.mxu0 0.0
    %717 = vmatprep.subr.mxu0 0.0
    %718 = vmatpush1.msra.mxu0 0.0
    %719 = vmatprep.subr.mxu0 0.0
    %720 = vmatpush1.msra.mxu0 0.0
    %721 = vmatprep.subr.mxu0 0.0
    %722 = vmatpush1.msra.mxu0 0.0
    %723 = vmatprep.subr.mxu0 0.0
    %724 = vmatpush1.msra.mxu0 0.0
    %725 = vmatprep.subr.mxu0 0.0
    %726 = vmatpush1.msra.mxu0 0.0
    %727 = vmatprep.subr.mxu0 0.0
    %728 = vmatpush1.msra.mxu0 0.0
    %729 = vmatprep.subr.mxu0 0.0
    %730 = vmatpush1.msra.mxu0 0.0
    %731 = vmatprep.subr.mxu0 0.0
    %732 = vmatpush1.msra.mxu0 0.0
    %733 = vmatprep.subr.mxu0 0.0
    %734 = vmatpush1.msra.mxu0 0.0
    %735 = vmatprep.subr.mxu0 0.0
    %736 = vmatpush1.msra.mxu0 0.0
    %737 = vmatprep.subr.mxu0 0.0
    %738 = vmatpush1.msra.mxu0 0.0
    %739 = vmatprep.subr.mxu0 0.0
    %740 = vmatpush1.msra.mxu0 0.0
    %741 = vmatprep.subr.mxu0 0.0
    %742 = vmatpush1.msra.mxu0 0.0
    %743 = vmatprep.subr.mxu0 0.0
    %744 = vmatpush1.msra.mxu0 0.0
    %745 = vmatprep.subr.mxu0 0.0
    %746 = vmatpush1.msra.mxu0 0.0
    %747 = vmatprep.subr.mxu0 0.0
    %748 = vmatpush1.msra.mxu0 0.0
    %749 = vmatprep.subr.mxu0 0.0
    %750 = vmatpush1.msra.mxu0 0.0
    %751 = vmatprep.subr.mxu0 0.0
    %752 = vmatpush1.msra.mxu0 0.0
    %753 = vmatprep.subr.mxu0 0.0
    %754 = vmatpush1.msra.mxu0 0.0
    %755 = vmatprep.subr.mxu0 0.0
    %756 = vmatpush1.msra.mxu0 0.0
    %757 = vmatprep.subr.mxu0 0.0
    %758 = vmatpush1.msra.mxu0 0.0
    %759 = vmatprep.subr.mxu0 0.0
    %760 = vmatpush1.msra.mxu0 0.0
    %761 = vmatprep.subr.mxu0 0.0
    %762 = vmatpush1.msra.mxu0 0.0
    %763 = vmatprep.subr.mxu0 0.0
    %764 = vmatpush1.msra.mxu0 0.0
    %765 = vmatprep.subr.mxu0 0.0
    %766 = vmatpush1.msra.mxu0 0.0
    %767 = vmatprep.subr.mxu0 0.0
    %768 = vmatpush1.msra.mxu0 0.0
    %769 = vmatprep.mubr.f32.mxu0 0.0
    %770 = vmatmul.mubr.f32.gmra.mrb[0].mxu0 %v260
    %v771 = vpop.f32.mrb[0].mxu0
    %v772 = vadd.f32 %v700, %v771
    %v773 = vpop.f32.mrb[0].mxu0
    %774 = vmatprep.mubr.f32.mxu0 0.0
    %775 = vmatmul.mubr.f32.gmra.mrb[0].mxu0 %v263
    %v776 = vpop.f32.mrb[0].mxu0
    %v777 = vadd.f32 %v702, %v776
    %v778 = vpop.f32.mrb[0].mxu0
    %779 = vdwg.mxu0
    %v781 = vlaneseq
    %v782 = vshrl.u32 %v781, 7
    %v783 = vsub.s32 0, %v782
    %v784 = vrot.slane %v615, %v783
    %v786 = vadd.f32 %v772, %v784
    %v787 = vadd.f32 %v777, %v784
    %v788 = vmul.f32 %v786, %v786
    %v789 = vmul.f32 %v787, %v787
    %v790 = vsel %vm258, %v788, 0.0
    %791 = vadd.xlane.f32.xlu0 %v790
    %v792 = vpop.xlane.xlu0 %791
    %v793 = vsel %vm258, %v789, 0.0
    %794 = vadd.xlane.f32.xlu0 %v793
    %v795 = vpop.xlane.xlu0 %794
    %v796 = vmax.f32 %v792, 1e-24
    %v797 = vmax.f32 %v795, 1e-24
    %v798 = vrsqrt.pop %v796
    %v799 = vrsqrt.pop %v797
    %v800 = vmul.f32 %v786, %v798
    %v801 = vmul.f32 %v787, %v799
    %802 = vrot.lane.b32.xlu0 %v609, 32
    %v803 = vpop.permute.xlu0 %802
    %804 = vrot.lane.b32.xlu0 %v610, 32
    %v805 = vpop.permute.xlu0 %804
    %810 = vrot.lane.b32.xlu0 %v800, 64
    %v811 = vpop.permute.xlu0 %810
    %812 = vrot.lane.b32.xlu0 %v801, 64
    %v813 = vpop.permute.xlu0 %812
    %v816 = vsel %vm350, %v390, %v803
    %v817 = vsel %vm350, %v391, %v805
    %vm818 = vcmask 523264
    %v819 = vsel %vm818, %v816, %v811
    %v820 = vsel %vm818, %v817, %v813
    %v821 = vld [vmem:[#allocation16] sm:$0xff]
    %v822 = vld [vmem:[#allocation16 + $0x8] sm:$0xff]
    %v823 = vld [vmem:[#allocation16 + $0x10] sm:$0xff]
    %v824 = vld [vmem:[#allocation16 + $0x18] sm:$0xff]
    %v825 = vld [vmem:[#allocation16 + $0x20] sm:$0xff]
    %v826 = vld [vmem:[#allocation16 + $0x28] sm:$0xff]
    %v827 = vld [vmem:[#allocation16 + $0x30] sm:$0xff]
    %v828 = vld [vmem:[#allocation16 + $0x38] sm:$0xff]
    %v829 = vld [vmem:[#allocation16 + $0x40] sm:$0xff]
    %v830 = vld [vmem:[#allocation16 + $0x48] sm:$0xff]
    %v831 = vld [vmem:[#allocation17] sm:$0x1]
    %v833 = vlaneseq
    %v834 = vshrl.u32 %v833, 7
    %v835 = vsub.s32 0, %v834
    %v836 = vrot.slane %v831, %v835
    %vm838 = vcmask 654336
    %v840 = vsel %vm838, %v819, 0
    %v843 = vsel %vm838, %v820, 0
    %845 = vmatprep.subr.mxu0 0.0
    %846 = vmatpush1.msra.mxu0 %v821
    %847 = vmatprep.subr.mxu0 0.0
    %848 = vmatpush1.msra.mxu0 %v822
    %849 = vmatprep.subr.mxu0 0.0
    %850 = vmatpush1.msra.mxu0 %v823
    %851 = vmatprep.subr.mxu0 0.0
    %852 = vmatpush1.msra.mxu0 %v824
    %853 = vmatprep.subr.mxu0 0.0
    %854 = vmatpush1.msra.mxu0 %v825
    %855 = vmatprep.subr.mxu0 0.0
    %856 = vmatpush1.msra.mxu0 %v826
    %857 = vmatprep.subr.mxu0 0.0
    %858 = vmatpush1.msra.mxu0 %v827
    %859 = vmatprep.subr.mxu0 0.0
    %860 = vmatpush1.msra.mxu0 %v828
    %861 = vmatprep.subr.mxu0 0.0
    %862 = vmatpush1.msra.mxu0 %v829
    %863 = vmatprep.subr.mxu0 0.0
    %864 = vmatpush1.msra.mxu0 %v830
    %865 = vmatprep.subr.mxu0 0.0
    %866 = vmatpush1.msra.mxu0 0.0
    %867 = vmatprep.subr.mxu0 0.0
    %868 = vmatpush1.msra.mxu0 0.0
    %869 = vmatprep.subr.mxu0 0.0
    %870 = vmatpush1.msra.mxu0 0.0
    %871 = vmatprep.subr.mxu0 0.0
    %872 = vmatpush1.msra.mxu0 0.0
    %873 = vmatprep.subr.mxu0 0.0
    %874 = vmatpush1.msra.mxu0 0.0
    %875 = vmatprep.subr.mxu0 0.0
    %876 = vmatpush1.msra.mxu0 0.0
    %877 = vmatprep.subr.mxu0 0.0
    %878 = vmatpush1.msra.mxu0 0.0
    %879 = vmatprep.subr.mxu0 0.0
    %880 = vmatpush1.msra.mxu0 0.0
    %881 = vmatprep.subr.mxu0 0.0
    %882 = vmatpush1.msra.mxu0 0.0
    %883 = vmatprep.subr.mxu0 0.0
    %884 = vmatpush1.msra.mxu0 0.0
    %885 = vmatprep.subr.mxu0 0.0
    %886 = vmatpush1.msra.mxu0 0.0
    %887 = vmatprep.subr.mxu0 0.0
    %888 = vmatpush1.msra.mxu0 0.0
    %889 = vmatprep.subr.mxu0 0.0
    %890 = vmatpush1.msra.mxu0 0.0
    %891 = vmatprep.subr.mxu0 0.0
    %892 = vmatpush1.msra.mxu0 0.0
    %893 = vmatprep.subr.mxu0 0.0
    %894 = vmatpush1.msra.mxu0 0.0
    %895 = vmatprep.subr.mxu0 0.0
    %896 = vmatpush1.msra.mxu0 0.0
    %897 = vmatprep.subr.mxu0 0.0
    %898 = vmatpush1.msra.mxu0 0.0
    %899 = vmatprep.subr.mxu0 0.0
    %900 = vmatpush1.msra.mxu0 0.0
    %901 = vmatprep.subr.mxu0 0.0
    %902 = vmatpush1.msra.mxu0 0.0
    %903 = vmatprep.subr.mxu0 0.0
    %904 = vmatpush1.msra.mxu0 0.0
    %905 = vmatprep.subr.mxu0 0.0
    %906 = vmatpush1.msra.mxu0 0.0
    %907 = vmatprep.subr.mxu0 0.0
    %908 = vmatpush1.msra.mxu0 0.0
    %909 = vmatprep.mubr.f32.mxu0 0.0
    %910 = vmatmul.mubr.f32.gmra.mrb[0].mxu0 %v840
    %v911 = vpop.f32.mrb[0].mxu0
    %v912 = vadd.f32 %v836, %v911
    %v913 = vpop.f32.mrb[0].mxu0
    %914 = vmatprep.mubr.f32.mxu0 0.0
    %915 = vmatmul.mubr.f32.gmra.mrb[0].mxu0 %v843
    %v916 = vpop.f32.mrb[0].mxu0
    %v917 = vadd.f32 %v836, %v916
    %v918 = vpop.f32.mrb[0].mxu0
    %919 = vdwg.mxu0
    %vm920 = vcmask 31744
    %v921 = vsel %vm920, %v912, -inf
    %922 = vmax.xlane.f32.xlu0 %v921
    %v923 = vpop.xlane.xlu0 %922
    %v924 = vsel %vm920, %v917, -inf
    %925 = vmax.xlane.f32.xlu0 %v924
    %v926 = vpop.xlane.xlu0 %925
    %v927 = vsub.f32 %v912, %v923
    %v928 = vsub.f32 %v917, %v926
    %v929 = vmul.f32 %v927, 1.442695
    %v930 = vpow.pop %v929
    %v931 = vmul.f32 %v928, 1.442695
    %v932 = vpow.pop %v931
    %v933 = vsel %vm920, %v930, 0.0
    %934 = vadd.xlane.f32.xlu0 %v933
    %v935 = vpop.xlane.xlu0 %934
    %v936 = vsel %vm920, %v932, 0.0
    %937 = vadd.xlane.f32.xlu0 %v936
    %v938 = vpop.xlane.xlu0 %937
    %v939 = vlog2.pop %v935
    %v940 = vmul.f32 %v939, 0.6931472
    %v941 = vlog2.pop %v938
    %v942 = vmul.f32 %v941, 0.6931472
    %v943 = vsub.f32 %v927, %v940
    %v944 = vsub.f32 %v928, %v942
    %945 = vst.msk [vmem:[#allocation19] sm:$0xff] %vm920, %v943
    %946 = vst.msk [vmem:[#allocation19 + $0x8] sm:$0xff] %vm920, %v944
    // Predicated region
    $region82: #{tpu_custom_call.1} parent=1 // pred_check
      _
    $region83: #{tpu_custom_call.1} parent=1 // pred_check_branch
      %948 = sbr.rel (0) target = $region85
    $region84: #{tpu_custom_call.1} parent=1 // pred_region
      %s950 = ssub.s32 256, 256
      %951 = vsyncadd [#allocation4], %s950
      %s952 = sshll.u32 [#allocation19], 4
      %s953 = int_to_ptr.vmem [resolvable:$true] %s952
      %958 = dma.vmem_to_hbm [thread:$0]  %s953, 256, %s10, [#allocation4], 128, 128, 8
    $region85: #{tpu_custom_call.1} parent=1 // pred_fallthru
      _
    // Predicated region
    $region86: #{tpu_custom_call.1} parent=1 // pred_check
      _
    $region87: #{tpu_custom_call.1} parent=1 // pred_check_branch
      %960 = sbr.rel (0) target = $region89
    $region88: #{tpu_custom_call.1} parent=1 // pred_region
      %961 = dma.done [#allocation4], 256
    $region89: #{tpu_custom_call.1} parent=1 // pred_fallthru
      _
    %962 = vsyncpa [#allocation3], 1
    %963 = vsyncpa [#allocation6], 1
    %964 = vsyncpa [#allocation9], 1
    %965 = vsyncpa [#allocation12], 1
    %966 = vsyncpa [#allocation15], 1
    %967 = vsyncpa [#allocation18], 1
    %968 = vsyncpa [#allocation4], 1

</llo_original>
